<compile_context>
chip_gen: v7x
topology: tpu7x:2x2x1
jax: 0.10.0
libtpu: 0.0.40
codegen_flags: <defaults>
</compile_context>

<pallas_src>
import jax
import jax.numpy as jnp
from jax.experimental import pallas as pl
from jax.experimental.pallas import tpu as pltpu

# ---------------- configuration (small, TPU-friendly) ----------------
B = 2     # batch
E = 32    # input_encoding_size
R = 32    # rnn_size
H = 32    # att_hid_size
A = 8     # att_size (number of attention regions)
NUM_LAYERS = 1

assert E == R == H, "packed layout assumes input_encoding_size == rnn_size == att_hid_size"

# weight-slab row layout
ROWS_LSTM = 3 * R              # rows   0: 96   [xt | fc | prev_h] -> [in|forget|it*2|out|r]
ROWS_ATT = 2 * R               # rows  96:160   [wA | wB | wC]
ROWS_VEC = 8                   # rows 160:168   bias / alpha rows (padded to 8)
TOT_ROWS = ROWS_LSTM + ROWS_ATT + ROWS_VEC   # 168
W_COLS = 5 * R                 # 160


# ---------------------------- Pallas kernel ---------------------------
def adaatt_core_kernel(xt_ref, const_ref, att_ref, w_ref, out_ref, hc_ref):
    # xt_ref   : (1, B, E)   per-step token embedding block
    # const_ref: (B, 3R)     [fc | h0 | c0]            (resident)
    # att_ref  : (B, A, R+H) [conv | conv_e]           (resident)
    # w_ref    : (168, 160)  packed weights + biases   (resident)
    # out_ref  : (1, B, 4R)  per-step [h | next_h | next_c | fake_region]
    # hc_ref   : (B, 2R)     VMEM scratch carrying [prev_h | prev_c]
    t = pl.program_id(0)

    const = const_ref[...]                       # (B, 3R)
    fc = const[:, 0:R]

    @pl.when(t == 0)
    def _():                                     # initialize carried state once
        hc_ref[...] = const[:, R:3 * R]

    prev_hc = hc_ref[...]                        # (B, 2R)
    prev_h = prev_hc[:, 0:R]
    prev_c = prev_hc[:, R:2 * R]

    xt = xt_ref[0]                               # (B, E)
    acts = jnp.concatenate([xt, fc, prev_h], axis=-1)      # (B, 3R)

    vec = w_ref[ROWS_LSTM + ROWS_ATT:TOT_ROWS, :]           # (8, 160) aligned load

    # ---------------- AdaAtt_lstm (one matmul, one sigmoid) ----------------
    pre = jnp.dot(acts, w_ref[0:ROWS_LSTM, :],
                  preferred_element_type=jnp.float32) + vec[0:1, :]   # (B, 5R)
    s = jax.nn.sigmoid(pre)
    in_gate = s[:, 0:R]
    forget_gate = s[:, R:2 * R]
    in_transform = 2.0 * s[:, 2 * R:3 * R] - 1.0            # tanh(x) = 2*sigmoid(2x)-1
    out_n5 = s[:, 3 * R:5 * R]                               # [out_gate | sigmoid(n5)]

    next_c = forget_gate * prev_c + in_gate * in_transform
    tanh_c = jnp.tanh(next_c)
    h_fr = out_n5 * jnp.concatenate([tanh_c, tanh_c], axis=-1)   # [next_h | fake_region]
    next_h = h_fr[:, 0:R]

    # carry state for the next grid step
    hc_ref[...] = jnp.concatenate([next_h, next_c], axis=-1)

    # ---------------- AdaAtt_attention (fused) ----------------
    att_rows = slice(ROWS_LSTM, ROWS_LSTM + ROWS_ATT)
    # stage A: [next_h | fake_region] @ blockdiag(ho_w, fr_w) + [ho_b | fr_b]
    a = jnp.dot(h_fr, w_ref[att_rows, 0:2 * E],
                preferred_element_type=jnp.float32) + vec[1:2, 0:2 * E]   # (B,2E)=[ho_pre|fr_pre]
    lane = jax.lax.broadcasted_iota(jnp.int32, a.shape, 1)
    sB = jnp.where(lane < E, jnp.tanh(a), jnp.maximum(a, 0.0))            # [ho_lin | fr]
    ho_lin = sB[:, 0:E]
    fr = sB[:, E:2 * E]

    # stage B: [ho_lin | fr] @ blockdiag(hoe_w, fre_w) + [hoe_b | fre_b]
    e = jnp.dot(sB, w_ref[att_rows, 2 * E:4 * E],
                preferred_element_type=jnp.float32) + vec[1:2, 2 * E:4 * E]  # (B,2H)=[ho_e|fr_e]
    ho_e = e[:, 0:H]
    fr_e = e[:, H:2 * H]

    aw = vec[2:3, 0:H]                            # (1, H) alpha_net weight (bias is a no-op)
    att_all = att_ref[...]                        # (B, A, R+H)
    conv = att_all[..., 0:R]                      # (B, A, R)
    conv_e = att_all[..., R:R + H]                # (B, A, H)

    # softmax over (A+1) regions without concatenating logits
    lf = jnp.sum(jnp.tanh(fr_e + ho_e) * aw, axis=-1, keepdims=True)           # (B, 1)
    lc = jnp.sum(jnp.tanh(conv_e + ho_e[:, None, :]) * aw[None, :, :], axis=-1)  # (B, A)
    m = jnp.maximum(jnp.max(lc, axis=-1, keepdims=True), lf)
    ef = jnp.exp(lf - m)
    ec = jnp.exp(lc - m)
    inv = pl.reciprocal(ef + jnp.sum(ec, axis=-1, keepdims=True), approx=False)  # (B, 1)

    vis = (ef * inv) * fr + jnp.sum((ec * inv)[:, :, None] * conv, axis=1)      # (B, R)
    atten_out = vis + ho_lin

    h = jnp.tanh(jnp.dot(atten_out, w_ref[ROWS_LSTM:ROWS_LSTM + R, 4 * E:4 * E + R],
                         preferred_element_type=jnp.float32) + vec[1:2, 4 * E:4 * E + R])

    # single lane-dense 128-wide store: [h | next_h | next_c | fake_region]
    out_ref[0] = jnp.concatenate([h, next_h, next_c, h_fr[:, R:2 * R]], axis=-1)


# ---------------------------- wrappers ----------------------------
def adaatt_core_seq(xt_seq, fc_feats, att_feats, p_att_feats, state, w_all):
    """Run the core over a sequence of T decode steps (grid=(T,), state carried in VMEM)."""
    T = xt_seq.shape[0]
    const_in = jnp.concatenate([fc_feats, state[0][0], state[1][0]], axis=-1)          # (B, 3R)
    att_pack = jnp.concatenate(
        [att_feats.reshape(B, A, R), p_att_feats.reshape(B, A, H)], axis=-1)           # (B, A, R+H)

    out = pl.pallas_call(
        adaatt_core_kernel,
        out_shape=jax.ShapeDtypeStruct((T, B, 4 * R), jnp.float32),
        grid_spec=pltpu.PrefetchScalarGridSpec(
            num_scalar_prefetch=0,
            grid=(T,),
            in_specs=[
                pl.BlockSpec((1, B, E), lambda t: (t, 0, 0)),          # per-step xt
                pl.BlockSpec((B, 3 * R), lambda t: (0, 0)),            # resident [fc|h0|c0]
                pl.BlockSpec((B, A, R + H), lambda t: (0, 0, 0)),      # resident attention slab
                pl.BlockSpec((TOT_ROWS, W_COLS), lambda t: (0, 0)),    # resident weight slab
            ],
            out_specs=pl.BlockSpec((1, B, 4 * R), lambda t: (t, 0, 0)),
            scratch_shapes=[pltpu.VMEM((B, 2 * R), jnp.float32)],      # carried [prev_h|prev_c]
        ),
        compiler_params=pltpu.CompilerParams(dimension_semantics=("arbitrary",)),
    )(xt_seq, const_in, att_pack, w_all)

    h_seq = out[:, :, 0:R]
    final_state = (out[-1, :, R:2 * R][None, ...], out[-1, :, 2 * R:3 * R][None, ...])
    return h_seq, final_state


def adaatt_core(xt, fc_feats, att_feats, p_att_feats, state, w_all):
    """Single-step API matching the PyTorch module forward (T=1 grid)."""
    h_seq, new_state = adaatt_core_seq(xt[None], fc_feats, att_feats, p_att_feats, state, w_all)
    return h_seq[0], new_state


# ---------------------- deterministic parameter init ----------------------
def make_linear(key, fan_in, fan_out):
    k1, k2 = jax.random.split(key)
    bound = 1.0 / (fan_in ** 0.5)
    w = jax.random.uniform(k1, (fan_in, fan_out), jnp.float32, -bound, bound)
    b = jax.random.uniform(k2, (1, fan_out), jnp.float32, -bound, bound)
    return w, b


def init_params(key):
    keys = jax.random.split(key, 12)
    w2h = make_linear(keys[0], E, 4 * R)
    v2h = make_linear(keys[1], R, 4 * R)
    h2h = make_linear(keys[2], R, 4 * R)
    rw2h = make_linear(keys[3], E, R)
    rv2h = make_linear(keys[4], R, R)
    rh2h = make_linear(keys[5], R, R)
    fr_lin = make_linear(keys[6], R, E)
    fr_emb = make_linear(keys[7], E, H)
    ho_lin = make_linear(keys[8], R, E)
    ho_emb = make_linear(keys[9], E, H)
    aw, ab_tmp = make_linear(keys[10], H, 1)
    alpha_w = aw.reshape(1, H)
    alpha_b = ab_tmp.reshape(1, 1)
    att2h = make_linear(keys[11], R, R)
    return (
        w2h[0], w2h[1], v2h[0], v2h[1], h2h[0], h2h[1],
        rw2h[0], rw2h[1], rv2h[0], rv2h[1], rh2h[0], rh2h[1],
        fr_lin[0], fr_lin[1], fr_emb[0], fr_emb[1],
        ho_lin[0], ho_lin[1], ho_emb[0], ho_emb[1],
        alpha_w, alpha_b, att2h[0], att2h[1],
    )


def pack_params(params):
    """One-time packing of the 24 PyTorch linears into one (168,160) weight slab."""
    (w2h_w, w2h_b, v2h_w, v2h_b, h2h_w, h2h_b,
     rw2h_w, rw2h_b, rv2h_w, rv2h_b, rh2h_w, rh2h_b,
     fr_w, fr_b, fre_w, fre_b, ho_w, ho_b, hoe_w, hoe_b,
     alpha_w, alpha_b, att2h_w, att2h_b) = params
    del alpha_b  # uniform logit shift before softmax is a no-op

    f32 = jnp.float32

    # ---- LSTM block: rows [xt | fc | prev_h], cols [in | forget | it*2 | out | r] ----
    def reorder(w):  # PyTorch chunk order [in|forget|out|it] -> [in|forget|it*2|out]
        return jnp.concatenate(
            [w[:, 0:R], w[:, R:2 * R], 2.0 * w[:, 3 * R:4 * R], w[:, 2 * R:3 * R]], axis=1)

    gate_w = jnp.concatenate([reorder(w2h_w), reorder(v2h_w), reorder(h2h_w)], axis=0)  # (3R,4R)
    gate_b = reorder(w2h_b + v2h_b + h2h_b)                                             # (1,4R)
    r_w = jnp.concatenate([rw2h_w, rv2h_w, rh2h_w], axis=0)                             # (3R,R)
    r_b = rw2h_b + rv2h_b + rh2h_b                                                      # (1,R)
    lstm_block = jnp.concatenate([gate_w, r_w], axis=1)                                 # (96,160)

    # ---- attention block: block-diagonal packing ----
    zRE = jnp.zeros((R, E), f32)
    wA = jnp.concatenate([jnp.concatenate([ho_w, zRE], axis=1),
                          jnp.concatenate([zRE, fr_w], axis=1)], axis=0)                # (2R,2E)
    zEH = jnp.zeros((E, H), f32)
    wB = jnp.concatenate([jnp.concatenate([hoe_w, zEH], axis=1),
                          jnp.concatenate([zEH, fre_w], axis=1)], axis=0)               # (2E,2H)
    wC = jnp.concatenate([att2h_w, jnp.zeros((R, R), f32)], axis=0)                     # (2R,R)
    att_block = jnp.concatenate([wA, wB, wC], axis=1)                                   # (64,160)

    # ---- bias / vector rows (padded to 8) ----
    row0 = jnp.concatenate([gate_b, r_b], axis=1)                                       # (1,160)
    row1 = jnp.concatenate([ho_b, fr_b, hoe_b, fre_b, att2h_b], axis=1)                 # (1,160)
    row2 = jnp.concatenate([alpha_w.reshape(1, H), jnp.zeros((1, 4 * R), f32)], axis=1)
    vec_block = jnp.concatenate([row0, row1, row2, jnp.zeros((5, W_COLS), f32)], axis=0)

    w_all = jnp.concatenate([lstm_block, att_block, vec_block], axis=0)                 # (168,160)
    assert w_all.shape == (TOT_ROWS, W_COLS)
    return w_all


# ---------------------- pure-JAX reference (PyTorch semantics) ----------------------
def reference(xt, fc_feats, att_feats, p_att_feats, state, params):
    (w2h_w, w2h_b, v2h_w, v2h_b, h2h_w, h2h_b,
     rw2h_w, rw2h_b, rv2h_w, rv2h_b, rh2h_w, rh2h_b,
     fr_w, fr_b, fre_w, fre_b, ho_w, ho_b, hoe_w, hoe_b,
     alpha_w, alpha_b, att2h_w, att2h_b) = params
    prev_h, prev_c = state[0][0], state[1][0]

    sums = xt @ w2h_w + w2h_b + fc_feats @ v2h_w + v2h_b + prev_h @ h2h_w + h2h_b
    sig = jax.nn.sigmoid(sums[:, : 3 * R])
    in_g, fo_g, ou_g = sig[:, :R], sig[:, R:2 * R], sig[:, 2 * R:3 * R]
    in_t = jnp.tanh(sums[:, 3 * R:])
    next_c = fo_g * prev_c + in_g * in_t
    tanh_c = jnp.tanh(next_c)
    next_h = ou_g * tanh_c
    n5 = xt @ rw2h_w + rw2h_b + fc_feats @ rv2h_w + rv2h_b + prev_h @ rh2h_w + rh2h_b
    fake_region = jax.nn.sigmoid(n5) * tanh_c
    h_out = next_h

    conv = att_feats.reshape(B, A, R)
    conv_e = p_att_feats.reshape(B, A, H)
    fr = jnp.maximum(fake_region @ fr_w + fr_b, 0.0)
    fr_e = fr @ fre_w + fre_b
    ho_lin = jnp.tanh(h_out @ ho_w + ho_b)
    ho_e = ho_lin @ hoe_w + hoe_b

    img_all = jnp.concatenate([fr[:, None, :], conv], axis=1)        # (B, A+1, R)
    img_all_e = jnp.concatenate([fr_e[:, None, :], conv_e], axis=1)  # (B, A+1, H)
    hA = jnp.tanh(img_all_e + ho_e[:, None, :])
    logits = jnp.einsum("bah,h->ba", hA, alpha_w[0]) + alpha_b[0, 0]
    PI = jax.nn.softmax(logits, axis=-1)
    vis = jnp.einsum("ba,bar->br", PI, img_all)
    atten_out = vis + ho_lin
    h = jnp.tanh(atten_out @ att2h_w + att2h_b)
    return h, (next_h[None], next_c[None])


if __name__ == "__main__":
    key = jax.random.PRNGKey(0)
    ks = jax.random.split(key, 6)
    T = 4
    xt_seq = jax.random.normal(ks[0], (T, B, E), jnp.float32)
    fc_feats = jax.random.normal(ks[1], (B, R), jnp.float32)
    att_feats = jax.random.normal(ks[2], (B, A, R), jnp.float32)
    p_att_feats = jax.random.normal(ks[3], (B, A, H), jnp.float32)
    state = (
        jax.random.normal(ks[4], (NUM_LAYERS, B, R), jnp.float32) * 0.1,
        jax.random.normal(ks[5], (NUM_LAYERS, B, R), jnp.float32) * 0.1,
    )
    params = init_params(jax.random.PRNGKey(1))
    w_all = pack_params(params)
    jax.block_until_ready(w_all)

    # T-step decode loop in one kernel launch (weights + state resident in VMEM)
    h_seq, final_state = adaatt_core_seq(xt_seq, fc_feats, att_feats, p_att_feats, state, w_all)
    jax.block_until_ready((h_seq, final_state))

    # single-step API equivalent to the PyTorch module forward
    h0, state1 = adaatt_core(xt_seq[0], fc_feats, att_feats, p_att_feats, state, w_all)
    jax.block_until_ready((h0, state1))

    # pure-JAX reference, stepped T times
    ref_state = state
    ref_hs = []
    for t in range(T):
        h_r, ref_state = reference(xt_seq[t], fc_feats, att_feats, p_att_feats, ref_state, params)
        ref_hs.append(h_r)
    h_ref_seq = jnp.stack(ref_hs, 0)

    assert jnp.allclose(h_seq, h_ref_seq, rtol=1e-4, atol=1e-4), "seq attention output mismatch"
    assert jnp.allclose(final_state[0], ref_state[0], rtol=1e-4, atol=1e-4), "final h-state mismatch"
    assert jnp.allclose(final_state[1], ref_state[1], rtol=1e-4, atol=1e-4), "final c-state mismatch"

    h_ref0, state_ref0 = reference(xt_seq[0], fc_feats, att_feats, p_att_feats, state, params)
    assert jnp.allclose(h0, h_ref0, rtol=1e-4, atol=1e-4), "single-step output mismatch"
    assert jnp.allclose(state1[0], state_ref0[0], rtol=1e-4, atol=1e-4), "single-step h-state mismatch"
    assert jnp.allclose(state1[1], state_ref0[1], rtol=1e-4, atol=1e-4), "single-step c-state mismatch"

    print("KERNEL_OK")
</pallas_src>

<mosaic_0001>
module attributes {stable_mosaic.version = 11 : i64} {
  func.func @adaatt_core_kernel(%arg0: i32, %arg1: memref<1x2x32xf32, #tpu.memory_space<vmem>>, %arg2: memref<2x96xf32, #tpu.memory_space<vmem>>, %arg3: memref<2x8x64xf32, #tpu.memory_space<vmem>>, %arg4: memref<168x160xf32, #tpu.memory_space<vmem>>, %arg5: memref<1x2x128xf32, #tpu.memory_space<vmem>>, %arg6: memref<2x64xf32, #tpu.memory_space<vmem>>) attributes {dimension_semantics = [#tpu.dimension_semantics<arbitrary>], iteration_bounds = array<i64: 4>, scalar_prefetch = 0 : i64, scratch_operands = 1 : i64, tpu.core_type = #tpu.core_type<tc>, window_params = [{transform_indices = @transform_0, window_bounds = array<i64: 1, 2, 32>}, {pipeline_mode = #tpu.pipeline_mode<synchronous>, transform_indices = @transform_1, window_bounds = array<i64: 2, 96>}, {pipeline_mode = #tpu.pipeline_mode<synchronous>, transform_indices = @transform_2, window_bounds = array<i64: 2, 8, 64>}, {pipeline_mode = #tpu.pipeline_mode<synchronous>, transform_indices = @transform_3, window_bounds = array<i64: 168, 160>}, {transform_indices = @transform_4, window_bounds = array<i64: 1, 2, 128>}]} {
    %c0 = arith.constant 0 : index
    %c0_0 = arith.constant 0 : index
    %0 = vector.load %arg2[%c0, %c0_0] : memref<2x96xf32, #tpu.memory_space<vmem>>, vector<2x96xf32>
    %1 = vector.extract_strided_slice %0 {offsets = [0, 0], sizes = [2, 32], strides = [1, 1]} : vector<2x96xf32> to vector<2x32xf32>
    %c0_i32 = arith.constant 0 : i32
    %2 = arith.cmpi eq, %arg0, %c0_i32 : i32
    %3 = arith.extui %2 : i1 to i32
    %c0_i32_1 = arith.constant 0 : i32
    %4 = arith.cmpi ne, %3, %c0_i32_1 : i32
    scf.if %4 {
      %112 = vector.extract_strided_slice %0 {offsets = [0, 32], sizes = [2, 64], strides = [1, 1]} : vector<2x96xf32> to vector<2x64xf32>
      %c0_33 = arith.constant 0 : index
      %c0_34 = arith.constant 0 : index
      %113 = vector.load %arg6[%c0_33, %c0_34] : memref<2x64xf32, #tpu.memory_space<vmem>>, vector<2x64xf32>
      tpu.vector_store %arg6[%c0_33, %c0_34], %112 {strides = array<i32>} : memref<2x64xf32, #tpu.memory_space<vmem>>, vector<2x64xf32>,
    } else {
    }
    %c0_2 = arith.constant 0 : index
    %c0_3 = arith.constant 0 : index
    %5 = vector.load %arg6[%c0_2, %c0_3] : memref<2x64xf32, #tpu.memory_space<vmem>>, vector<2x64xf32>
    %6 = vector.extract_strided_slice %5 {offsets = [0, 0], sizes = [2, 32], strides = [1, 1]} : vector<2x64xf32> to vector<2x32xf32>
    %7 = vector.extract_strided_slice %5 {offsets = [0, 32], sizes = [2, 32], strides = [1, 1]} : vector<2x64xf32> to vector<2x32xf32>
    %c0_4 = arith.constant 0 : index
    %c0_5 = arith.constant 0 : index
    %c0_6 = arith.constant 0 : index
    %8 = vector.load %arg1[%c0_4, %c0_5, %c0_6] : memref<1x2x32xf32, #tpu.memory_space<vmem>>, vector<1x2x32xf32>
    %9 = vector.shape_cast %8 : vector<1x2x32xf32> to vector<2x32xf32>
    %10 = tpu.concatenate %9, %1, %6 in 1 : vector<2x32xf32>, vector<2x32xf32>, vector<2x32xf32> -> vector<2x96xf32>
    %c160 = arith.constant 160 : index
    %c0_7 = arith.constant 0 : index
    %11 = vector.load %arg4[%c160, %c0_7] : memref<168x160xf32, #tpu.memory_space<vmem>>, vector<8x160xf32>
    %c0_8 = arith.constant 0 : index
    %c0_9 = arith.constant 0 : index
    %12 = vector.load %arg4[%c0_8, %c0_9] : memref<168x160xf32, #tpu.memory_space<vmem>>, vector<96x160xf32>
    %cst = arith.constant dense<0.000000e+00> : vector<2x160xf32>
    %13 = tpu.matmul %10, %12, %cst {dimension_numbers = #tpu.dot_dimension_numbers<[1], [0], [0], [1], [0, 0, 1, 1], [], []>} : vector<2x96xf32>, vector<96x160xf32>, vector<2x160xf32> -> vector<2x160xf32>
    %14 = vector.extract_strided_slice %11 {offsets = [0, 0], sizes = [1, 160], strides = [1, 1]} : vector<8x160xf32> to vector<1x160xf32>
    %15 = vector.broadcast %14 : vector<1x160xf32> to vector<2x160xf32>
    %16 = arith.addf %13, %15 : vector<2x160xf32>
    %17 = arith.negf %16 : vector<2x160xf32>
    %18 = math.exp %17 : vector<2x160xf32>
    %cst_10 = arith.constant 1.000000e+00 : f32
    %19 = vector.broadcast %cst_10 : f32 to vector<2x160xf32>
    %20 = arith.addf %19, %18 : vector<2x160xf32>
    %21 = arith.divf %19, %20 : vector<2x160xf32>
    %22 = vector.extract_strided_slice %21 {offsets = [0, 0], sizes = [2, 32], strides = [1, 1]} : vector<2x160xf32> to vector<2x32xf32>
    %23 = vector.extract_strided_slice %21 {offsets = [0, 32], sizes = [2, 32], strides = [1, 1]} : vector<2x160xf32> to vector<2x32xf32>
    %24 = vector.extract_strided_slice %21 {offsets = [0, 64], sizes = [2, 32], strides = [1, 1]} : vector<2x160xf32> to vector<2x32xf32>
    %cst_11 = arith.constant 2.000000e+00 : f32
    %25 = vector.broadcast %cst_11 : f32 to vector<2x32xf32>
    %26 = arith.mulf %25, %24 : vector<2x32xf32>
    %cst_12 = arith.constant 1.000000e+00 : f32
    %27 = vector.broadcast %cst_12 : f32 to vector<2x32xf32>
    %28 = arith.subf %26, %27 : vector<2x32xf32>
    %29 = vector.extract_strided_slice %21 {offsets = [0, 96], sizes = [2, 64], strides = [1, 1]} : vector<2x160xf32> to vector<2x64xf32>
    %30 = arith.mulf %23, %7 : vector<2x32xf32>
    %31 = arith.mulf %22, %28 : vector<2x32xf32>
    %32 = arith.addf %30, %31 : vector<2x32xf32>
    %33 = math.tanh %32 : vector<2x32xf32>
    %34 = tpu.concatenate %33, %33 in 1 : vector<2x32xf32>, vector<2x32xf32> -> vector<2x64xf32>
    %35 = arith.mulf %29, %34 : vector<2x64xf32>
    %36 = vector.extract_strided_slice %35 {offsets = [0, 0], sizes = [2, 32], strides = [1, 1]} : vector<2x64xf32> to vector<2x32xf32>
    %37 = tpu.concatenate %36, %32 in 1 : vector<2x32xf32>, vector<2x32xf32> -> vector<2x64xf32>
    %c0_13 = arith.constant 0 : index
    %c0_14 = arith.constant 0 : index
    %38 = vector.load %arg6[%c0_13, %c0_14] : memref<2x64xf32, #tpu.memory_space<vmem>>, vector<2x64xf32>
    tpu.vector_store %arg6[%c0_13, %c0_14], %37 {strides = array<i32>} : memref<2x64xf32, #tpu.memory_space<vmem>>, vector<2x64xf32>,
    %c96 = arith.constant 96 : index
    %c0_15 = arith.constant 0 : index
    %39 = vector.load %arg4[%c96, %c0_15] : memref<168x160xf32, #tpu.memory_space<vmem>>, vector<64x64xf32>
    %cst_16 = arith.constant dense<0.000000e+00> : vector<2x64xf32>
    %40 = tpu.matmul %35, %39, %cst_16 {dimension_numbers = #tpu.dot_dimension_numbers<[1], [0], [0], [1], [0, 0, 1, 1], [], []>} : vector<2x64xf32>, vector<64x64xf32>, vector<2x64xf32> -> vector<2x64xf32>
    %41 = vector.extract_strided_slice %11 {offsets = [1, 0], sizes = [1, 64], strides = [1, 1]} : vector<8x160xf32> to vector<1x64xf32>
    %42 = vector.broadcast %41 : vector<1x64xf32> to vector<2x64xf32>
    %43 = arith.addf %40, %42 : vector<2x64xf32>
    %44 = tpu.iota {dimensions = array<i32: 1>} : vector<2x64xi32>
    %c32_i32 = arith.constant 32 : i32
    %45 = vector.broadcast %c32_i32 : i32 to vector<2x64xi32>
    %46 = arith.cmpi slt, %44, %45 : vector<2x64xi32>
    %47 = math.tanh %43 : vector<2x64xf32>
    %cst_17 = arith.constant 0.000000e+00 : f32
    %48 = vector.broadcast %cst_17 : f32 to vector<2x64xf32>
    %49 = arith.maximumf %43, %48 : vector<2x64xf32>
    %50 = arith.select %46, %47, %49 : vector<2x64xi1>, vector<2x64xf32>
    %51 = vector.extract_strided_slice %50 {offsets = [0, 0], sizes = [2, 32], strides = [1, 1]} : vector<2x64xf32> to vector<2x32xf32>
    %52 = vector.extract_strided_slice %50 {offsets = [0, 32], sizes = [2, 32], strides = [1, 1]} : vector<2x64xf32> to vector<2x32xf32>
    %c96_18 = arith.constant 96 : index
    %c64 = arith.constant 64 : index
    %53 = vector.load %arg4[%c96_18, %c64] : memref<168x160xf32, #tpu.memory_space<vmem>>, vector<64x64xf32>
    %cst_19 = arith.constant dense<0.000000e+00> : vector<2x64xf32>
    %54 = tpu.matmul %50, %53, %cst_19 {dimension_numbers = #tpu.dot_dimension_numbers<[1], [0], [0], [1], [0, 0, 1, 1], [], []>} : vector<2x64xf32>, vector<64x64xf32>, vector<2x64xf32> -> vector<2x64xf32>
    %55 = vector.extract_strided_slice %11 {offsets = [1, 64], sizes = [1, 64], strides = [1, 1]} : vector<8x160xf32> to vector<1x64xf32>
    %56 = vector.broadcast %55 : vector<1x64xf32> to vector<2x64xf32>
    %57 = arith.addf %54, %56 : vector<2x64xf32>
    %58 = vector.extract_strided_slice %57 {offsets = [0, 0], sizes = [2, 32], strides = [1, 1]} : vector<2x64xf32> to vector<2x32xf32>
    %59 = vector.extract_strided_slice %57 {offsets = [0, 32], sizes = [2, 32], strides = [1, 1]} : vector<2x64xf32> to vector<2x32xf32>
    %60 = vector.extract_strided_slice %11 {offsets = [2, 0], sizes = [1, 32], strides = [1, 1]} : vector<8x160xf32> to vector<1x32xf32>
    %c0_20 = arith.constant 0 : index
    %c0_21 = arith.constant 0 : index
    %c0_22 = arith.constant 0 : index
    %61 = vector.load %arg3[%c0_20, %c0_21, %c0_22] : memref<2x8x64xf32, #tpu.memory_space<vmem>>, vector<2x8x64xf32>
    %62 = vector.extract_strided_slice %61 {offsets = [0, 0, 0], sizes = [2, 8, 32], strides = [1, 1, 1]} : vector<2x8x64xf32> to vector<2x8x32xf32>
    %63 = vector.extract_strided_slice %61 {offsets = [0, 0, 32], sizes = [2, 8, 32], strides = [1, 1, 1]} : vector<2x8x64xf32> to vector<2x8x32xf32>
    %64 = arith.addf %59, %58 : vector<2x32xf32>
    %65 = math.tanh %64 : vector<2x32xf32>
    %66 = vector.broadcast %60 : vector<1x32xf32> to vector<2x32xf32>
    %67 = arith.mulf %65, %66 : vector<2x32xf32>
    %cst_23 = arith.constant dense<0.000000e+00> : vector<2xf32>
    %68 = vector.multi_reduction <add>, %67, %cst_23 [1] : vector<2x32xf32> to vector<2xf32>
    %69 = vector.shape_cast %68 : vector<2xf32> to vector<2x1xf32>
    %70 = vector.shape_cast %58 : vector<2x32xf32> to vector<2x1x32xf32>
    %71 = vector.broadcast %70 : vector<2x1x32xf32> to vector<2x8x32xf32>
    %72 = arith.addf %63, %71 : vector<2x8x32xf32>
    %73 = math.tanh %72 : vector<2x8x32xf32>
    %74 = vector.shape_cast %60 : vector<1x32xf32> to vector<1x1x32xf32>
    %75 = vector.broadcast %74 : vector<1x1x32xf32> to vector<2x8x32xf32>
    %76 = arith.mulf %73, %75 : vector<2x8x32xf32>
    %cst_24 = arith.constant dense<0.000000e+00> : vector<2x8xf32>
    %77 = vector.multi_reduction <add>, %76, %cst_24 [2] : vector<2x8x32xf32> to vector<2x8xf32>
    %cst_25 = arith.constant dense<0xFF800000> : vector<2xf32>
    %78 = vector.multi_reduction <maximumf>, %77, %cst_25 [1] : vector<2x8xf32> to vector<2xf32>
    %79 = vector.shape_cast %78 : vector<2xf32> to vector<2x1xf32>
    %80 = arith.maximumf %79, %69 : vector<2x1xf32>
    %81 = arith.subf %69, %80 : vector<2x1xf32>
    %82 = math.exp %81 : vector<2x1xf32>
    %83 = vector.broadcast %80 : vector<2x1xf32> to vector<2x8xf32>
    %84 = arith.subf %77, %83 : vector<2x8xf32>
    %85 = math.exp %84 : vector<2x8xf32>
    %cst_26 = arith.constant dense<0.000000e+00> : vector<2xf32>
    %86 = vector.multi_reduction <add>, %85, %cst_26 [1] : vector<2x8xf32> to vector<2xf32>
    %87 = vector.shape_cast %86 : vector<2xf32> to vector<2x1xf32>
    %88 = arith.addf %82, %87 : vector<2x1xf32>
    %89 = tpu.reciprocal %88 : vector<2x1xf32> -> vector<2x1xf32>
    %90 = arith.mulf %82, %89 : vector<2x1xf32>
    %91 = vector.broadcast %90 : vector<2x1xf32> to vector<2x32xf32>
    %92 = arith.mulf %91, %52 : vector<2x32xf32>
    %93 = vector.broadcast %89 : vector<2x1xf32> to vector<2x8xf32>
    %94 = arith.mulf %85, %93 : vector<2x8xf32>
    %95 = vector.shape_cast %94 : vector<2x8xf32> to vector<2x8x1xf32>
    %96 = vector.broadcast %95 : vector<2x8x1xf32> to vector<2x8x32xf32>
    %97 = arith.mulf %96, %62 : vector<2x8x32xf32>
    %cst_27 = arith.constant dense<0.000000e+00> : vector<2x32xf32>
    %98 = vector.multi_reduction <add>, %97, %cst_27 [1] : vector<2x8x32xf32> to vector<2x32xf32>
    %99 = arith.addf %92, %98 : vector<2x32xf32>
    %100 = arith.addf %99, %51 : vector<2x32xf32>
    %c96_28 = arith.constant 96 : index
    %c128 = arith.constant 128 : index
    %101 = vector.load %arg4[%c96_28, %c128] : memref<168x160xf32, #tpu.memory_space<vmem>>, vector<32x32xf32>
    %cst_29 = arith.constant dense<0.000000e+00> : vector<2x32xf32>
    %102 = tpu.matmul %100, %101, %cst_29 {dimension_numbers = #tpu.dot_dimension_numbers<[1], [0], [0], [1], [0, 0, 1, 1], [], []>} : vector<2x32xf32>, vector<32x32xf32>, vector<2x32xf32> -> vector<2x32xf32>
    %103 = vector.extract_strided_slice %11 {offsets = [1, 128], sizes = [1, 32], strides = [1, 1]} : vector<8x160xf32> to vector<1x32xf32>
    %104 = vector.broadcast %103 : vector<1x32xf32> to vector<2x32xf32>
    %105 = arith.addf %102, %104 : vector<2x32xf32>
    %106 = math.tanh %105 : vector<2x32xf32>
    %107 = vector.extract_strided_slice %35 {offsets = [0, 32], sizes = [2, 32], strides = [1, 1]} : vector<2x64xf32> to vector<2x32xf32>
    %108 = tpu.concatenate %106, %36, %32, %107 in 1 : vector<2x32xf32>, vector<2x32xf32>, vector<2x32xf32>, vector<2x32xf32> -> vector<2x128xf32>
    %c0_30 = arith.constant 0 : index
    %c0_31 = arith.constant 0 : index
    %c0_32 = arith.constant 0 : index
    %109 = vector.load %arg5[%c0_30, %c0_31, %c0_32] : memref<1x2x128xf32, #tpu.memory_space<vmem>>, vector<1x2x128xf32>
    %110 = vector.shape_cast %109 : vector<1x2x128xf32> to vector<2x128xf32>
    %111 = vector.shape_cast %108 : vector<2x128xf32> to vector<1x2x128xf32>
    tpu.vector_store %arg5[%c0_30, %c0_31, %c0_32], %111 {strides = array<i32>} : memref<1x2x128xf32, #tpu.memory_space<vmem>>, vector<1x2x128xf32>,
    return
  }
  func.func @transform_0(%arg0: i32) -> (i32, i32, i32) {
    %c0_i32 = arith.constant 0 : i32
    %c0_i32_0 = arith.constant 0 : i32
    %c0_i32_1 = arith.constant 0 : i32
    return %arg0, %c0_i32, %c0_i32_0 : i32, i32, i32
  }
  func.func @transform_1(%arg0: i32) -> (i32, i32) {
    %c0_i32 = arith.constant 0 : i32
    %c0_i32_0 = arith.constant 0 : i32
    %c0_i32_1 = arith.constant 0 : i32
    return %c0_i32, %c0_i32_0 : i32, i32
  }
  func.func @transform_2(%arg0: i32) -> (i32, i32, i32) {
    %c0_i32 = arith.constant 0 : i32
    %c0_i32_0 = arith.constant 0 : i32
    %c0_i32_1 = arith.constant 0 : i32
    %c0_i32_2 = arith.constant 0 : i32
    return %c0_i32, %c0_i32_0, %c0_i32_1 : i32, i32, i32
  }
  func.func @transform_3(%arg0: i32) -> (i32, i32) {
    %c0_i32 = arith.constant 0 : i32
    %c0_i32_0 = arith.constant 0 : i32
    %c0_i32_1 = arith.constant 0 : i32
    return %c0_i32, %c0_i32_0 : i32, i32
  }
  func.func @transform_4(%arg0: i32) -> (i32, i32, i32) {
    %c0_i32 = arith.constant 0 : i32
    %c0_i32_0 = arith.constant 0 : i32
    %c0_i32_1 = arith.constant 0 : i32
    return %arg0, %c0_i32, %c0_i32_0 : i32, i32, i32
  }
}

</mosaic_0001>

<llo_original>
// kernel: tpu_custom_call.1
$region0: #{tpu_custom_call.1}
  #allocation0 [shape = 'u32[]', space=smem, size = 0x4, offset = 0x4, fixed_abs, tag = 'smem constant byte address 0x4 - core index']
  #allocation1 [shape = 'u32[144,128]{1,0:T(1,128)}', space=vmem, size = 0x12000, scoped, tag = 'internal scratch']
  #allocation2 [shape = 'f32[2,64]{1,0:T(2,128)}', space=vmem, size = 0x400, scoped, tag = 'scratch operand']
  %s0 = inlined_call_operand.vmem [shape: f32[4,2,32], index: 0, kind: input, shape index: {}]
  %s1 = inlined_call_operand.vmem [shape: f32[2,96], index: 1, kind: input, shape index: {}]
  %s2 = inlined_call_operand.vmem [shape: f32[2,8,64], index: 2, kind: input, shape index: {}]
  %s3 = inlined_call_operand.vmem [shape: f32[168,160], index: 3, kind: input, shape index: {}]
  %s4 = inlined_call_operand.hbm [shape: f32[4,2,128], index: 4, kind: output, shape index: {}]
  %s5 = sld [smem:[#allocation0]]
  $region53: #{tpu_custom_call.1} parent=0
    _
  %s7 = ssub.s32 1, %s5
  %s8 = scalar_select 0, %s7, %s5
  $region1: #{tpu_custom_call.1} parent=0
    #allocation3 [shape = 'u8[2048]{0}', space=vmem, size = 0x800, scoped, tag = 'output window, operand 0']
    #allocation4 [shape = 's32[2]{0}', space=sflag, size = 0x8, scoped, tag = 'scoped memory for tpu_custom_call.1']
    %9 = vsyncpa [#allocation4], 0
    %s10 = scalar_lea.sflag [#allocation4], 1
    %11 = vsyncpa %s10, 0
    loop: start=0, step=1, limit=6
    $region2: #{tpu_custom_call.1} parent=1 // loop_pre_header
      _
    $region3: #{tpu_custom_call.1} parent=1 // loop_header
      %s13 = sphi 0, %s17
      %p14 = scmp.ge.s32.totalorder %s13, 6
      %s23 = sphi 0, %s25
      %s26 = sphi 0, %s23
      %s27 = sphi 0, %s26
      %s43 = sphi 0, %s27
      %s47 = sphi 0, %s47
      %s49 = sphi 0, %s47
      %s50 = sphi 0, %s49
      %s64 = sphi 0, %s50
      %s68 = sphi 0, %s68
      %s70 = sphi 0, %s68
      %s71 = sphi 0, %s70
      %s85 = sphi 0, %s71
      %s89 = sphi 0, %s89
      %s91 = sphi 0, %s89
      %s92 = sphi 0, %s91
      %s106 = sphi 0, %s92
      %s112 = sphi 0, %s114
      %s115 = sphi 0, %s112
      %s116 = sphi 0, %s115
      %s132 = sphi 0, %s116
    $region4: #{tpu_custom_call.1} parent=1 // loop_header_branch
      %16 = sbr.rel (%p14) target = $region8
    $region5: #{tpu_custom_call.1} parent=1 // loop_body
      %s18 = ssub.s32 %s13, 1
      %s19 = ssub.s32 %s13, 2
      %s20 = sadd.s32 %s13, 1
      %s21 = ssub.s32 %s13, %s20
      %p22 = scmp.eq.s32.totalorder %s21, 0
      %s24 = sadd.s32 %s23, 1
      %s25 = scalar_select %p22, %s23, %s24
      %p28 = pneg %p22
      %p29 = scmp.eq.s32.totalorder %s13, 3
      %p30 = por %p28, %p29
      %p31 = scmp.ne.s32.totalorder %s23, %s26
      %p32 = scmp.eq.s32.totalorder %s13, 0
      %p33 = por %p31, %p32
      %p34 = scmp.ne.s32.totalorder %s23, %s26
      %p35 = scmp.eq.s32.totalorder %s18, 3
      %p36 = por %p34, %p35
      %p37 = scmp.ne.s32.totalorder %s26, %s27
      %p38 = scmp.eq.s32.totalorder %s18, 0
      %p39 = por %p37, %p38
      %p40 = scmp.ne.s32.totalorder %s26, %s27
      %p41 = scmp.eq.s32.totalorder %s19, 3
      %p42 = por %p40, %p41
      %p44 = scmp.ne.s32.totalorder %s27, %s43
      %p45 = scmp.eq.s32.totalorder %s19, 0
      %p46 = por %p44, %p45
      %s48 = sadd.s32 %s47, 1
      %p51 = scmp.eq.s32.totalorder %s13, 3
      %p52 = scmp.ne.s32.totalorder %s47, %s49
      %p53 = scmp.eq.s32.totalorder %s13, 0
      %p54 = por %p52, %p53
      %p55 = scmp.ne.s32.totalorder %s47, %s49
      %p56 = scmp.eq.s32.totalorder %s18, 3
      %p57 = por %p55, %p56
      %p58 = scmp.ne.s32.totalorder %s49, %s50
      %p59 = scmp.eq.s32.totalorder %s18, 0
      %p60 = por %p58, %p59
      %p61 = scmp.ne.s32.totalorder %s49, %s50
      %p62 = scmp.eq.s32.totalorder %s19, 3
      %p63 = por %p61, %p62
      %p65 = scmp.ne.s32.totalorder %s50, %s64
      %p66 = scmp.eq.s32.totalorder %s19, 0
      %p67 = por %p65, %p66
      %s69 = sadd.s32 %s68, 1
      %p72 = scmp.eq.s32.totalorder %s13, 3
      %p73 = scmp.ne.s32.totalorder %s68, %s70
      %p74 = scmp.eq.s32.totalorder %s13, 0
      %p75 = por %p73, %p74
      %p76 = scmp.ne.s32.totalorder %s68, %s70
      %p77 = scmp.eq.s32.totalorder %s18, 3
      %p78 = por %p76, %p77
      %p79 = scmp.ne.s32.totalorder %s70, %s71
      %p80 = scmp.eq.s32.totalorder %s18, 0
      %p81 = por %p79, %p80
      %p82 = scmp.ne.s32.totalorder %s70, %s71
      %p83 = scmp.eq.s32.totalorder %s19, 3
      %p84 = por %p82, %p83
      %p86 = scmp.ne.s32.totalorder %s71, %s85
      %p87 = scmp.eq.s32.totalorder %s19, 0
      %p88 = por %p86, %p87
      %s90 = sadd.s32 %s89, 1
      %p93 = scmp.eq.s32.totalorder %s13, 3
      %p94 = scmp.ne.s32.totalorder %s89, %s91
      %p95 = scmp.eq.s32.totalorder %s13, 0
      %p96 = por %p94, %p95
      %p97 = scmp.ne.s32.totalorder %s89, %s91
      %p98 = scmp.eq.s32.totalorder %s18, 3
      %p99 = por %p97, %p98
      %p100 = scmp.ne.s32.totalorder %s91, %s92
      %p101 = scmp.eq.s32.totalorder %s18, 0
      %p102 = por %p100, %p101
      %p103 = scmp.ne.s32.totalorder %s91, %s92
      %p104 = scmp.eq.s32.totalorder %s19, 3
      %p105 = por %p103, %p104
      %p107 = scmp.ne.s32.totalorder %s92, %s106
      %p108 = scmp.eq.s32.totalorder %s19, 0
      %p109 = por %p107, %p108
      %s110 = ssub.s32 %s13, %s20
      %p111 = scmp.eq.s32.totalorder %s110, 0
      %s113 = sadd.s32 %s112, 1
      %s114 = scalar_select %p111, %s112, %s113
      %p117 = pneg %p111
      %p118 = scmp.eq.s32.totalorder %s13, 3
      %p119 = por %p117, %p118
      %p120 = scmp.ne.s32.totalorder %s112, %s115
      %p121 = scmp.eq.s32.totalorder %s13, 0
      %p122 = por %p120, %p121
      %p123 = scmp.ne.s32.totalorder %s112, %s115
      %p124 = scmp.eq.s32.totalorder %s18, 3
      %p125 = por %p123, %p124
      %p126 = scmp.ne.s32.totalorder %s115, %s116
      %p127 = scmp.eq.s32.totalorder %s18, 0
      %p128 = por %p126, %p127
      %p129 = scmp.ne.s32.totalorder %s115, %s116
      %p130 = scmp.eq.s32.totalorder %s19, 3
      %p131 = por %p129, %p130
      %p133 = scmp.ne.s32.totalorder %s116, %s132
      %p134 = scmp.eq.s32.totalorder %s19, 0
      %p135 = por %p133, %p134
      %p136 = scmp.le.s32.totalorder 1, %s13
      %p137 = scmp.lt.s32.totalorder %s13, 5
      %p138 = pnand %p136, %p137
      %p139 = pneg %p138
      // Predicated region
      $region9: #{tpu_custom_call.1} parent=5 // pred_check
        _
      $region10: #{tpu_custom_call.1} parent=5 // pred_check_branch
        %141 = sbr.rel (%p138) target = $region12
      $region11: #{tpu_custom_call.1} parent=5 // pred_region
        %s142 = ssub.s32 %s13, 1
        // Predicated region
        $region13: #{tpu_custom_call.1} parent=11 // pred_check
          %p143 = pneg %p60
        $region14: #{tpu_custom_call.1} parent=11 // pred_check_branch
          %145 = sbr.rel (%p143) target = $region16
        $region15: #{tpu_custom_call.1} parent=11 // pred_region
          _
        $region16: #{tpu_custom_call.1} parent=11 // pred_fallthru
          _
        // Predicated region
        $region17: #{tpu_custom_call.1} parent=11 // pred_check
          %p146 = pneg %p81
        $region18: #{tpu_custom_call.1} parent=11 // pred_check_branch
          %148 = sbr.rel (%p146) target = $region20
        $region19: #{tpu_custom_call.1} parent=11 // pred_region
          _
        $region20: #{tpu_custom_call.1} parent=11 // pred_fallthru
          _
        // Predicated region
        $region21: #{tpu_custom_call.1} parent=11 // pred_check
          %p149 = pneg %p102
        $region22: #{tpu_custom_call.1} parent=11 // pred_check_branch
          %151 = sbr.rel (%p149) target = $region24
        $region23: #{tpu_custom_call.1} parent=11 // pred_region
          _
        $region24: #{tpu_custom_call.1} parent=11 // pred_fallthru
          _
      $region12: #{tpu_custom_call.1} parent=5 // pred_fallthru
        _
      %p152 = scmp.lt.s32.totalorder %s13, 4
      // Predicated region
      $region25: #{tpu_custom_call.1} parent=5 // pred_check
        %p153 = pneg %p152
      $region26: #{tpu_custom_call.1} parent=5 // pred_check_branch
        %155 = sbr.rel (%p153) target = $region28
      $region27: #{tpu_custom_call.1} parent=5 // pred_region
        // Predicated region
        $region29: #{tpu_custom_call.1} parent=27 // pred_check
          %p156 = pneg %p33
        $region30: #{tpu_custom_call.1} parent=27 // pred_check_branch
          %158 = sbr.rel (%p156) target = $region32
        $region31: #{tpu_custom_call.1} parent=27 // pred_region
          %p159 = scmp.lt.s32.totalorder %s13, 3
          %s160 = scalar_select %p159, %s13, 3
          %s161 = smul.addr %s160, 2
          %s162 = scalar_lea.vmem %s0, %s161
        $region32: #{tpu_custom_call.1} parent=27 // pred_fallthru
          _
      $region28: #{tpu_custom_call.1} parent=5 // pred_fallthru
        _
      %p163 = scmp.le.s32.totalorder 1, %s13
      %p164 = scmp.lt.s32.totalorder %s13, 5
      %p165 = pnand %p163, %p164
      %p166 = pneg %p165
      // Predicated region
      $region33: #{tpu_custom_call.1} parent=5 // pred_check
        _
      $region34: #{tpu_custom_call.1} parent=5 // pred_check_branch
        %168 = sbr.rel (%p165) target = $region36
      $region35: #{tpu_custom_call.1} parent=5 // pred_region
        %s169 = ssub.s32 %s13, 1
        %p170 = scmp.lt.s32.totalorder %s18, 3
        %s171 = scalar_select %p170, %s18, 3
        %s172 = smul.addr %s171, 2
        %s173 = scalar_lea.vmem %s0, %s172
        %p174 = pneg %p39
        %p175 = pneg %p36
        %p176 = pneg %p60
        %p177 = pneg %p57
        %p178 = pneg %p81
        %p179 = pneg %p78
        %p180 = pneg %p102
        %p181 = pneg %p99
        %p182 = pneg %p128
        %p183 = pneg %p125
        %s184 = sand.u32 %s115, 1
        %s185 = scalar_lea.sflag [#allocation4], %s184
        %s186 = sand.u32 %s115, 1
        %s187 = smul.addr %s186, 2
        %s188 = scalar_lea.vmem [#allocation3], %s187
        %p189 = scmp.lt.s32.totalorder %s18, 3
        %s190 = scalar_select %p189, %s18, 3
        %s191 = smul.addr %s190, 2
        %s192 = scalar_lea.vmem %s0, %s191
        %v193 = vld [vmem:[%s1] sm:$0x3]
        %p194 = scmp.eq.s32.totalorder %s18, 0
        // Predicated region
        $region37: #{tpu_custom_call.1} parent=35 // pred_check
          %p195 = pneg %p194
        $region38: #{tpu_custom_call.1} parent=35 // pred_check_branch
          %197 = sbr.rel (%p195) target = $region40
        $region39: #{tpu_custom_call.1} parent=35 // pred_region
          %199 = vrot.lane.b32.xlu0 %v193, 96
          %v200 = vpop.permute.xlu0 %199
          %vm202 = vcmask 517120
          %203 = vst.msk [vmem:[#allocation2] sm:$0x3] %vm202, %v200
        $region40: #{tpu_custom_call.1} parent=35 // pred_fallthru
          _
        %v204 = vld [vmem:[#allocation2] sm:$0x3]
        %v205 = vld [vmem:[%s192] sm:$0x3]
        %207 = vrot.lane.b32.xlu0 %v193, 32
        %v208 = vpop.permute.xlu0 %207
        %211 = vrot.lane.b32.xlu0 %v204, 64
        %v212 = vpop.permute.xlu0 %211
        %vm214 = vcmask 261120
        %v215 = vsel %vm214, %v205, %v208
        %vm216 = vcmask 523264
        %v217 = vsel %vm216, %v215, %v212
        %v218 = vld [vmem:[%s3 + $0x140] sm:$0xff]
        %v219 = vld [vmem:[%s3 + $0x148] sm:$0xff]
        %v220 = vld [vmem:[%s3] sm:$0xff]
        %v221 = vld [vmem:[%s3 + $0x8] sm:$0xff]
        %v222 = vld [vmem:[%s3 + $0x10] sm:$0xff]
        %v223 = vld [vmem:[%s3 + $0x18] sm:$0xff]
        %v224 = vld [vmem:[%s3 + $0x20] sm:$0xff]
        %v225 = vld [vmem:[%s3 + $0x28] sm:$0xff]
        %v226 = vld [vmem:[%s3 + $0x30] sm:$0xff]
        %v227 = vld [vmem:[%s3 + $0x38] sm:$0xff]
        %v228 = vld [vmem:[%s3 + $0x40] sm:$0xff]
        %v229 = vld [vmem:[%s3 + $0x48] sm:$0xff]
        %v230 = vld [vmem:[%s3 + $0x50] sm:$0xff]
        %v231 = vld [vmem:[%s3 + $0x58] sm:$0xff]
        %v232 = vld [vmem:[%s3 + $0x60] sm:$0xff]
        %v233 = vld [vmem:[%s3 + $0x68] sm:$0xff]
        %v234 = vld [vmem:[%s3 + $0x70] sm:$0xff]
        %v235 = vld [vmem:[%s3 + $0x78] sm:$0xff]
        %v236 = vld [vmem:[%s3 + $0x80] sm:$0xff]
        %v237 = vld [vmem:[%s3 + $0x88] sm:$0xff]
        %v238 = vld [vmem:[%s3 + $0x90] sm:$0xff]
        %v239 = vld [vmem:[%s3 + $0x98] sm:$0xff]
        %v240 = vld [vmem:[%s3 + $0xa0] sm:$0xff]
        %v241 = vld [vmem:[%s3 + $0xa8] sm:$0xff]
        %v242 = vld [vmem:[%s3 + $0xb0] sm:$0xff]
        %v243 = vld [vmem:[%s3 + $0xb8] sm:$0xff]
        %v244 = vlaneseq
        %v245 = vshrl.u32 %v244, 7
        %v246 = vsub.s32 0, %v245
        %v247 = vrot.slane %v218, %v246
        %v248 = vlaneseq
        %v249 = vshrl.u32 %v248, 7
        %v250 = vsub.s32 0, %v249
        %v251 = vrot.slane %v219, %v250
        %vm252 = vcmask 785408
        %v254 = vsel %vm252, %v217, 0
        %256 = vmatprep.subr.mxu0 %v221
        %257 = vmatpush1.msra.mxu0 %v220
        %258 = vmatprep.subr.mxu0 %v223
        %259 = vmatpush1.msra.mxu0 %v222
        %260 = vmatprep.subr.mxu0 %v225
        %261 = vmatpush1.msra.mxu0 %v224
        %262 = vmatprep.subr.mxu0 %v227
        %263 = vmatpush1.msra.mxu0 %v226
        %264 = vmatprep.subr.mxu0 %v229
        %265 = vmatpush1.msra.mxu0 %v228
        %266 = vmatprep.subr.mxu0 %v231
        %267 = vmatpush1.msra.mxu0 %v230
        %268 = vmatprep.subr.mxu0 %v233
        %269 = vmatpush1.msra.mxu0 %v232
        %270 = vmatprep.subr.mxu0 %v235
        %271 = vmatpush1.msra.mxu0 %v234
        %272 = vmatprep.subr.mxu0 %v237
        %273 = vmatpush1.msra.mxu0 %v236
        %274 = vmatprep.subr.mxu0 %v239
        %275 = vmatpush1.msra.mxu0 %v238
        %276 = vmatprep.subr.mxu0 %v241
        %277 = vmatpush1.msra.mxu0 %v240
        %278 = vmatprep.subr.mxu0 %v243
        %279 = vmatpush1.msra.mxu0 %v242
        %280 = vmatprep.subr.mxu0 0.0
        %281 = vmatpush1.msra.mxu0 0.0
        %282 = vmatprep.subr.mxu0 0.0
        %283 = vmatpush1.msra.mxu0 0.0
        %284 = vmatprep.subr.mxu0 0.0
        %285 = vmatpush1.msra.mxu0 0.0
        %286 = vmatprep.subr.mxu0 0.0
        %287 = vmatpush1.msra.mxu0 0.0
        %288 = vmatprep.subr.mxu0 0.0
        %289 = vmatpush1.msra.mxu0 0.0
        %290 = vmatprep.subr.mxu0 0.0
        %291 = vmatpush1.msra.mxu0 0.0
        %292 = vmatprep.subr.mxu0 0.0
        %293 = vmatpush1.msra.mxu0 0.0
        %294 = vmatprep.subr.mxu0 0.0
        %295 = vmatpush1.msra.mxu0 0.0
        %296 = vmatprep.subr.mxu0 0.0
        %297 = vmatpush1.msra.mxu0 0.0
        %298 = vmatprep.subr.mxu0 0.0
        %299 = vmatpush1.msra.mxu0 0.0
        %300 = vmatprep.subr.mxu0 0.0
        %301 = vmatpush1.msra.mxu0 0.0
        %302 = vmatprep.subr.mxu0 0.0
        %303 = vmatpush1.msra.mxu0 0.0
        %304 = vmatprep.subr.mxu0 0.0
        %305 = vmatpush1.msra.mxu0 0.0
        %306 = vmatprep.subr.mxu0 0.0
        %307 = vmatpush1.msra.mxu0 0.0
        %308 = vmatprep.subr.mxu0 0.0
        %309 = vmatpush1.msra.mxu0 0.0
        %310 = vmatprep.subr.mxu0 0.0
        %311 = vmatpush1.msra.mxu0 0.0
        %312 = vmatprep.subr.mxu0 0.0
        %313 = vmatpush1.msra.mxu0 0.0
        %314 = vmatprep.subr.mxu0 0.0
        %315 = vmatpush1.msra.mxu0 0.0
        %316 = vmatprep.subr.mxu0 0.0
        %317 = vmatpush1.msra.mxu0 0.0
        %318 = vmatprep.subr.mxu0 0.0
        %319 = vmatpush1.msra.mxu0 0.0
        %320 = vmatprep.mubr.f32.mxu0 0.0
        %321 = vmatmul.mubr.f32.gmra.mrb[0].mxu0 %v254
        %v322 = vpop.f32.mrb[0].mxu0
        %v323 = vadd.f32 %v247, %v322
        %v324 = vpop.f32.mrb[0].mxu0
        %v325 = vadd.f32 %v251, %v324
        %326 = vdwg.mxu0
        %v327 = vxor.u32 %v323, 2147483648
        %v328 = vxor.u32 %v325, 2147483648
        %v329 = vmul.f32 %v327, 1.442695
        %v330 = vpow.pop %v329
        %v331 = vmul.f32 %v328, 1.442695
        %v332 = vpow.pop %v331
        %v333 = vadd.f32 %v330, 1.0
        %v334 = vadd.f32 %v332, 1.0
        %v335 = vrcp.pop %v333
        %v336 = vmul.f32 1.0, %v335
        %v337 = vrcp.pop %v334
        %v338 = vmul.f32 1.0, %v337
        %v339 = vmul.f32 %v336, 2.0
        %v340 = vsub.f32 %v339, 1.0
        %v341 = vmul.f32 %v336, %v204
        %343 = vrot.lane.b32.xlu0 %v340, 64
        %v344 = vpop.permute.xlu0 %343
        %v346 = vmul.f32 %v336, %v344
        %348 = vrot.lane.b32.xlu0 %v346, 32
        %v349 = vpop.permute.xlu0 %348
        %v351 = vadd.f32 %v341, %v349
        %v352 = vtanh.pop %v351
        %354 = vrot.lane.b32.xlu0 %v352, 96
        %v355 = vpop.permute.xlu0 %354
        %v357 = vsel %vm214, %v355, %v352
        %359 = vrot.lane.b32.xlu0 %v357, 96
        %v360 = vpop.permute.xlu0 %359
        %v362 = vmul.f32 %v336, %v360
        %v363 = vmul.f32 %v338, %v360
        %365 = vrot.lane.b32.xlu0 %v362, 32
        %v366 = vpop.permute.xlu0 %365
        %v368 = vsel %vm214, %v366, %v351
        %vm369 = vcmask 517120
        %370 = vst.msk [vmem:[#allocation2] sm:$0x3] %vm369, %v368
        %v371 = vld [vmem:[%s3 + $0xc0] sm:$0xff]
        %v372 = vld [vmem:[%s3 + $0xd0] sm:$0xff]
        %v373 = vld [vmem:[%s3 + $0xe0] sm:$0xff]
        %v374 = vld [vmem:[%s3 + $0xf0] sm:$0xff]
        %v375 = vld [vmem:[%s3 + $0x100] sm:$0xff]
        %v376 = vld [vmem:[%s3 + $0x110] sm:$0xff]
        %v377 = vld [vmem:[%s3 + $0x120] sm:$0xff]
        %v378 = vld [vmem:[%s3 + $0x130] sm:$0xff]
        %v379 = vlaneseq
        %v380 = vshrl.u32 %v379, 7
        %v381 = vsub.s32 1, %v380
        %v382 = vrot.slane %v218, %v381
        %384 = vrot.lane.b32.xlu0 %v363, 32
        %v385 = vpop.permute.xlu0 %384
        %v386 = vsel %vm214, %v366, %v385
        %v387 = vsel %vm216, %v386, 0
        %389 = vmatprep.subr.mxu0 0.0
        %390 = vmatpush1.msra.mxu0 %v371
        %391 = vmatprep.subr.mxu0 0.0
        %392 = vmatpush1.msra.mxu0 %v372
        %393 = vmatprep.subr.mxu0 0.0
        %394 = vmatpush1.msra.mxu0 %v373
        %395 = vmatprep.subr.mxu0 0.0
        %396 = vmatpush1.msra.mxu0 %v374
        %397 = vmatprep.subr.mxu0 0.0
        %398 = vmatpush1.msra.mxu0 %v375
        %399 = vmatprep.subr.mxu0 0.0
        %400 = vmatpush1.msra.mxu0 %v376
        %401 = vmatprep.subr.mxu0 0.0
        %402 = vmatpush1.msra.mxu0 %v377
        %403 = vmatprep.subr.mxu0 0.0
        %404 = vmatpush1.msra.mxu0 %v378
        %405 = vmatprep.subr.mxu0 0.0
        %406 = vmatpush1.msra.mxu0 0.0
        %407 = vmatprep.subr.mxu0 0.0
        %408 = vmatpush1.msra.mxu0 0.0
        %409 = vmatprep.subr.mxu0 0.0
        %410 = vmatpush1.msra.mxu0 0.0
        %411 = vmatprep.subr.mxu0 0.0
        %412 = vmatpush1.msra.mxu0 0.0
        %413 = vmatprep.subr.mxu0 0.0
        %414 = vmatpush1.msra.mxu0 0.0
        %415 = vmatprep.subr.mxu0 0.0
        %416 = vmatpush1.msra.mxu0 0.0
        %417 = vmatprep.subr.mxu0 0.0
        %418 = vmatpush1.msra.mxu0 0.0
        %419 = vmatprep.subr.mxu0 0.0
        %420 = vmatpush1.msra.mxu0 0.0
        %421 = vmatprep.subr.mxu0 0.0
        %422 = vmatpush1.msra.mxu0 0.0
        %423 = vmatprep.subr.mxu0 0.0
        %424 = vmatpush1.msra.mxu0 0.0
        %425 = vmatprep.subr.mxu0 0.0
        %426 = vmatpush1.msra.mxu0 0.0
        %427 = vmatprep.subr.mxu0 0.0
        %428 = vmatpush1.msra.mxu0 0.0
        %429 = vmatprep.subr.mxu0 0.0
        %430 = vmatpush1.msra.mxu0 0.0
        %431 = vmatprep.subr.mxu0 0.0
        %432 = vmatpush1.msra.mxu0 0.0
        %433 = vmatprep.subr.mxu0 0.0
        %434 = vmatpush1.msra.mxu0 0.0
        %435 = vmatprep.subr.mxu0 0.0
        %436 = vmatpush1.msra.mxu0 0.0
        %437 = vmatprep.subr.mxu0 0.0
        %438 = vmatpush1.msra.mxu0 0.0
        %439 = vmatprep.subr.mxu0 0.0
        %440 = vmatpush1.msra.mxu0 0.0
        %441 = vmatprep.subr.mxu0 0.0
        %442 = vmatpush1.msra.mxu0 0.0
        %443 = vmatprep.subr.mxu0 0.0
        %444 = vmatpush1.msra.mxu0 0.0
        %445 = vmatprep.subr.mxu0 0.0
        %446 = vmatpush1.msra.mxu0 0.0
        %447 = vmatprep.subr.mxu0 0.0
        %448 = vmatpush1.msra.mxu0 0.0
        %449 = vmatprep.subr.mxu0 0.0
        %450 = vmatpush1.msra.mxu0 0.0
        %451 = vmatprep.subr.mxu0 0.0
        %452 = vmatpush1.msra.mxu0 0.0
        %453 = vmatprep.mubr.f32.mxu0 0.0
        %454 = vmatmul.mubr.f32.gmra.mrb[0].mxu0 %v387
        %v455 = vpop.f32.mrb[0].mxu0
        %v456 = vadd.f32 %v382, %v455
        %v457 = vpop.f32.mrb[0].mxu0
        %458 = vdwg.mxu0
        %v459 = vlaneseq
        %v460 = vand.u32 %v459, 127
        %vm461 = vcmp.lt.s32.totalorder %v460, 32
        %v462 = vtanh.pop %v456
        %v463 = vmax.f32 %v456, 0.0
        %v464 = vsel %vm461, %v462, %v463
        %473 = vrot.lane.b32.xlu0 %v371, 64
        %v474 = vpop.permute.xlu0 %473
        %475 = vrot.lane.b32.xlu0 %v372, 64
        %v476 = vpop.permute.xlu0 %475
        %477 = vrot.lane.b32.xlu0 %v373, 64
        %v478 = vpop.permute.xlu0 %477
        %479 = vrot.lane.b32.xlu0 %v374, 64
        %v480 = vpop.permute.xlu0 %479
        %481 = vrot.lane.b32.xlu0 %v375, 64
        %v482 = vpop.permute.xlu0 %481
        %483 = vrot.lane.b32.xlu0 %v376, 64
        %v484 = vpop.permute.xlu0 %483
        %485 = vrot.lane.b32.xlu0 %v377, 64
        %v486 = vpop.permute.xlu0 %485
        %487 = vrot.lane.b32.xlu0 %v378, 64
        %v488 = vpop.permute.xlu0 %487
        %498 = vrot.lane.b32.xlu0 %v382, 64
        %v499 = vpop.permute.xlu0 %498
        %v502 = vsel %vm216, %v464, 0
        %504 = vmatprep.subr.mxu0 0.0
        %505 = vmatpush1.msra.mxu0 %v474
        %506 = vmatprep.subr.mxu0 0.0
        %507 = vmatpush1.msra.mxu0 %v476
        %508 = vmatprep.subr.mxu0 0.0
        %509 = vmatpush1.msra.mxu0 %v478
        %510 = vmatprep.subr.mxu0 0.0
        %511 = vmatpush1.msra.mxu0 %v480
        %512 = vmatprep.subr.mxu0 0.0
        %513 = vmatpush1.msra.mxu0 %v482
        %514 = vmatprep.subr.mxu0 0.0
        %515 = vmatpush1.msra.mxu0 %v484
        %516 = vmatprep.subr.mxu0 0.0
        %517 = vmatpush1.msra.mxu0 %v486
        %518 = vmatprep.subr.mxu0 0.0
        %519 = vmatpush1.msra.mxu0 %v488
        %520 = vmatprep.subr.mxu0 0.0
        %521 = vmatpush1.msra.mxu0 0.0
        %522 = vmatprep.subr.mxu0 0.0
        %523 = vmatpush1.msra.mxu0 0.0
        %524 = vmatprep.subr.mxu0 0.0
        %525 = vmatpush1.msra.mxu0 0.0
        %526 = vmatprep.subr.mxu0 0.0
        %527 = vmatpush1.msra.mxu0 0.0
        %528 = vmatprep.subr.mxu0 0.0
        %529 = vmatpush1.msra.mxu0 0.0
        %530 = vmatprep.subr.mxu0 0.0
        %531 = vmatpush1.msra.mxu0 0.0
        %532 = vmatprep.subr.mxu0 0.0
        %533 = vmatpush1.msra.mxu0 0.0
        %534 = vmatprep.subr.mxu0 0.0
        %535 = vmatpush1.msra.mxu0 0.0
        %536 = vmatprep.subr.mxu0 0.0
        %537 = vmatpush1.msra.mxu0 0.0
        %538 = vmatprep.subr.mxu0 0.0
        %539 = vmatpush1.msra.mxu0 0.0
        %540 = vmatprep.subr.mxu0 0.0
        %541 = vmatpush1.msra.mxu0 0.0
        %542 = vmatprep.subr.mxu0 0.0
        %543 = vmatpush1.msra.mxu0 0.0
        %544 = vmatprep.subr.mxu0 0.0
        %545 = vmatpush1.msra.mxu0 0.0
        %546 = vmatprep.subr.mxu0 0.0
        %547 = vmatpush1.msra.mxu0 0.0
        %548 = vmatprep.subr.mxu0 0.0
        %549 = vmatpush1.msra.mxu0 0.0
        %550 = vmatprep.subr.mxu0 0.0
        %551 = vmatpush1.msra.mxu0 0.0
        %552 = vmatprep.subr.mxu0 0.0
        %553 = vmatpush1.msra.mxu0 0.0
        %554 = vmatprep.subr.mxu0 0.0
        %555 = vmatpush1.msra.mxu0 0.0
        %556 = vmatprep.subr.mxu0 0.0
        %557 = vmatpush1.msra.mxu0 0.0
        %558 = vmatprep.subr.mxu0 0.0
        %559 = vmatpush1.msra.mxu0 0.0
        %560 = vmatprep.subr.mxu0 0.0
        %561 = vmatpush1.msra.mxu0 0.0
        %562 = vmatprep.subr.mxu0 0.0
        %563 = vmatpush1.msra.mxu0 0.0
        %564 = vmatprep.subr.mxu0 0.0
        %565 = vmatpush1.msra.mxu0 0.0
        %566 = vmatprep.subr.mxu0 0.0
        %567 = vmatpush1.msra.mxu0 0.0
        %568 = vmatprep.mubr.f32.mxu0 0.0
        %569 = vmatmul.mubr.f32.gmra.mrb[0].mxu0 %v502
        %v570 = vpop.f32.mrb[0].mxu0
        %v571 = vadd.f32 %v499, %v570
        %v572 = vpop.f32.mrb[0].mxu0
        %573 = vdwg.mxu0
        %v574 = vld [vmem:[%s2] sm:$0xff]
        %v575 = vld [vmem:[%s2 + $0x8] sm:$0xff]
        %577 = vrot.lane.b32.xlu0 %v571, 32
        %v578 = vpop.permute.xlu0 %577
        %v580 = vadd.f32 %v571, %v578
        %v581 = vtanh.pop %v580
        %v582 = vlaneseq
        %v583 = vshrl.u32 %v582, 7
        %v584 = vsub.s32 2, %v583
        %v585 = vrot.slane %v218, %v584
        %587 = vrot.lane.b32.xlu0 %v585, 32
        %v588 = vpop.permute.xlu0 %587
        %v590 = vmul.f32 %v581, %v588
        %592 = vrot.lane.b32.xlu0 %v590, 96
        %v593 = vpop.permute.xlu0 %592
        %vm595 = vcmask 254976
        %v596 = vsel %vm595, %v593, 0.0
        %597 = vadd.xlane.f32.xlu0 %v596
        %v598 = vpop.xlane.xlu0 %597
        %v600 = vunpack.c.l.s4 1966171168
        %v601 = vunpack.c.0.s8 %v600
        %v602 = vlaneseq
        %v603 = vshrl.u32 %v602, 7
        %v604 = vsub.s32 %v601, %v603
        %v605 = vrot.slane %v571, %v604
        %v606 = vcombine.high %v605, %v605
        %v608 = vunpack.c.l.s4 1966171168
        %v609 = vunpack.c.0.s8 %v608
        %v610 = vlaneseq
        %v611 = vshrl.u32 %v610, 7
        %v612 = vsub.s32 %v609, %v611
        %v613 = vrot.slane %v605, %v612
        %v615 = vunpack.c.l.s4 1966171168
        %v616 = vunpack.c.0.s8 %v615
        %v617 = vlaneseq
        %v618 = vshrl.u32 %v617, 7
        %v619 = vsub.s32 %v616, %v618
        %v620 = vrot.slane %v606, %v619
        %v621 = vlaneseq
        %v622 = vshrl.u32 %v621, 7
        %v623 = vsub.s32 0, %v622
        %v624 = vrot.slane %v613, %v623
        %v625 = vlaneseq
        %v626 = vshrl.u32 %v625, 7
        %v627 = vsub.s32 0, %v626
        %v628 = vrot.slane %v620, %v627
        %629 = vrot.lane.b32.xlu0 %v624, 32
        %v630 = vpop.permute.xlu0 %629
        %631 = vrot.lane.b32.xlu0 %v628, 32
        %v632 = vpop.permute.xlu0 %631
        %v635 = vadd.f32 %v574, %v630
        %v636 = vadd.f32 %v575, %v632
        %v637 = vtanh.pop %v635
        %v638 = vtanh.pop %v636
        %v639 = vmul.f32 %v637, %v588
        %v640 = vmul.f32 %v638, %v588
        %643 = vrot.lane.b32.xlu0 %v639, 96
        %v644 = vpop.permute.xlu0 %643
        %645 = vrot.lane.b32.xlu0 %v640, 96
        %v646 = vpop.permute.xlu0 %645
        %v649 = vsel %vm214, %v644, 0.0
        %650 = vadd.xlane.f32.xlu0 %v649
        %v651 = vpop.xlane.xlu0 %650
        %v652 = vsel %vm214, %v646, 0.0
        %653 = vadd.xlane.f32.xlu0 %v652
        %v654 = vpop.xlane.xlu0 %653
        %v657 = vlaneseq
        %v658 = vshrl.u32 %v657, 7
        %v659 = vsub.s32 %v460, %v658
        %v660 = vrot.slane %v651, %v659
        %v661 = vlaneseq
        %v662 = vshrl.u32 %v661, 7
        %v663 = vsub.s32 %v460, %v662
        %v664 = vrot.slane %v654, %v663
        %vm665 = vcmask 1041409
        %v666 = vsel %vm665, %v664, %v660
        %vm668 = vcmask 58368
        %v669 = vsel %vm668, %v666, -inf
        %670 = vmax.xlane.f32.xlu0 %v669
        %v671 = vpop.xlane.xlu0 %670
        %v672 = vmax.f32 %v671, %v598
        %v673 = vsub.f32 %v598, %v672
        %v674 = vmul.f32 %v673, 1.442695
        %v675 = vpow.pop %v674
        %v677 = vlaneseq
        %v678 = vshrl.u32 %v677, 7
        %v679 = vsub.s32 0, %v678
        %v680 = vrot.slane %v672, %v679
        %v681 = vlaneseq
        %v682 = vshrl.u32 %v681, 7
        %v683 = vsub.s32 1, %v682
        %v684 = vrot.slane %v672, %v683
        %v687 = vsub.f32 %v651, %v680
        %v688 = vsub.f32 %v654, %v684
        %v689 = vmul.f32 %v687, 1.442695
        %v690 = vpow.pop %v689
        %v691 = vmul.f32 %v688, 1.442695
        %v692 = vpow.pop %v691
        %695 = vset.pattern.permute.xlu0 0
        %696 = vperm.xlu0 %695, %v690
        %v697 = vpop.permute.xlu0 %696
        %698 = vset.pattern.permute.xlu0 0
        %699 = vperm.xlu0 %698, %v692
        %v700 = vpop.permute.xlu0 %699
        %v701 = vlaneseq
        %v702 = vshrl.u32 %v701, 7
        %v703 = vsub.s32 %v460, %v702
        %v704 = vrot.slane %v697, %v703
        %v705 = vlaneseq
        %v706 = vshrl.u32 %v705, 7
        %v707 = vsub.s32 %v460, %v706
        %v708 = vrot.slane %v700, %v707
        %v709 = vsel %vm665, %v708, %v704
        %v711 = vsel %vm668, %v709, 0.0
        %712 = vadd.xlane.f32.xlu0 %v711
        %v713 = vpop.xlane.xlu0 %712
        %v714 = vadd.f32 %v675, %v713
        %v715 = vrcp.pop %v714
        %v716 = vmul.f32 %v675, %v715
        %v717 = vmul.f32 %v716, %v464
        %v719 = vlaneseq
        %v720 = vshrl.u32 %v719, 7
        %v721 = vsub.s32 0, %v720
        %v722 = vrot.slane %v715, %v721
        %v723 = vlaneseq
        %v724 = vshrl.u32 %v723, 7
        %v725 = vsub.s32 1, %v724
        %v726 = vrot.slane %v715, %v725
        %v729 = vmul.f32 %v690, %v722
        %v730 = vmul.f32 %v692, %v726
        %732 = vset.pattern.permute.xlu0 0
        %733 = vperm.xlu0 %732, %v729
        %v734 = vpop.permute.xlu0 %733
        %737 = vset.pattern.permute.xlu0 0
        %738 = vperm.xlu0 %737, %v730
        %v739 = vpop.permute.xlu0 %738
        %v741 = vmul.f32 %v734, %v574
        %v742 = vmul.f32 %v739, %v575
        %v743 = vsel %vm214, %v741, 0.0
        %v744 = vrot.slane %v743, 4
        %v745 = vadd.f32 %v743, %v744
        %v746 = vrot.slane %v745, 2
        %v747 = vadd.f32 %v745, %v746
        %v748 = vrot.slane %v747, 1
        %v749 = vadd.f32 %v747, %v748
        %v750 = vsel %vm214, %v742, 0.0
        %v751 = vrot.slane %v750, 4
        %v752 = vadd.f32 %v750, %v751
        %v753 = vrot.slane %v752, 2
        %v754 = vadd.f32 %v752, %v753
        %v755 = vrot.slane %v754, 1
        %v756 = vadd.f32 %v754, %v755
        %v759 = vsel %vm665, %v756, %v749
        %760 = vrot.lane.b32.xlu0 %v759, 32
        %v761 = vpop.permute.xlu0 %760
        %v763 = vadd.f32 %v717, %v761
        %764 = vrot.lane.b32.xlu0 %v464, 32
        %v765 = vpop.permute.xlu0 %764
        %v767 = vadd.f32 %v763, %v765
        %v768 = vld [vmem:[%s3 + $0xc8] sm:$0xff]
        %v769 = vld [vmem:[%s3 + $0xd8] sm:$0xff]
        %v770 = vld [vmem:[%s3 + $0xe8] sm:$0xff]
        %v771 = vld [vmem:[%s3 + $0xf8] sm:$0xff]
        %v772 = vlaneseq
        %v773 = vshrl.u32 %v772, 7
        %v774 = vsub.s32 1, %v773
        %v775 = vrot.slane %v219, %v774
        %777 = vrot.lane.b32.xlu0 %v767, 96
        %v778 = vpop.permute.xlu0 %777
        %v779 = vsel %vm214, %v778, 0
        %781 = vmatprep.subr.mxu0 0.0
        %782 = vmatpush1.msra.mxu0 %v768
        %783 = vmatprep.subr.mxu0 0.0
        %784 = vmatpush1.msra.mxu0 %v769
        %785 = vmatprep.subr.mxu0 0.0
        %786 = vmatpush1.msra.mxu0 %v770
        %787 = vmatprep.subr.mxu0 0.0
        %788 = vmatpush1.msra.mxu0 %v771
        %789 = vmatprep.subr.mxu0 0.0
        %790 = vmatpush1.msra.mxu0 0.0
        %791 = vmatprep.subr.mxu0 0.0
        %792 = vmatpush1.msra.mxu0 0.0
        %793 = vmatprep.subr.mxu0 0.0
        %794 = vmatpush1.msra.mxu0 0.0
        %795 = vmatprep.subr.mxu0 0.0
        %796 = vmatpush1.msra.mxu0 0.0
        %797 = vmatprep.subr.mxu0 0.0
        %798 = vmatpush1.msra.mxu0 0.0
        %799 = vmatprep.subr.mxu0 0.0
        %800 = vmatpush1.msra.mxu0 0.0
        %801 = vmatprep.subr.mxu0 0.0
        %802 = vmatpush1.msra.mxu0 0.0
        %803 = vmatprep.subr.mxu0 0.0
        %804 = vmatpush1.msra.mxu0 0.0
        %805 = vmatprep.subr.mxu0 0.0
        %806 = vmatpush1.msra.mxu0 0.0
        %807 = vmatprep.subr.mxu0 0.0
        %808 = vmatpush1.msra.mxu0 0.0
        %809 = vmatprep.subr.mxu0 0.0
        %810 = vmatpush1.msra.mxu0 0.0
        %811 = vmatprep.subr.mxu0 0.0
        %812 = vmatpush1.msra.mxu0 0.0
        %813 = vmatprep.subr.mxu0 0.0
        %814 = vmatpush1.msra.mxu0 0.0
        %815 = vmatprep.subr.mxu0 0.0
        %816 = vmatpush1.msra.mxu0 0.0
        %817 = vmatprep.subr.mxu0 0.0
        %818 = vmatpush1.msra.mxu0 0.0
        %819 = vmatprep.subr.mxu0 0.0
        %820 = vmatpush1.msra.mxu0 0.0
        %821 = vmatprep.subr.mxu0 0.0
        %822 = vmatpush1.msra.mxu0 0.0
        %823 = vmatprep.subr.mxu0 0.0
        %824 = vmatpush1.msra.mxu0 0.0
        %825 = vmatprep.subr.mxu0 0.0
        %826 = vmatpush1.msra.mxu0 0.0
        %827 = vmatprep.subr.mxu0 0.0
        %828 = vmatpush1.msra.mxu0 0.0
        %829 = vmatprep.subr.mxu0 0.0
        %830 = vmatpush1.msra.mxu0 0.0
        %831 = vmatprep.subr.mxu0 0.0
        %832 = vmatpush1.msra.mxu0 0.0
        %833 = vmatprep.subr.mxu0 0.0
        %834 = vmatpush1.msra.mxu0 0.0
        %835 = vmatprep.subr.mxu0 0.0
        %836 = vmatpush1.msra.mxu0 0.0
        %837 = vmatprep.subr.mxu0 0.0
        %838 = vmatpush1.msra.mxu0 0.0
        %839 = vmatprep.subr.mxu0 0.0
        %840 = vmatpush1.msra.mxu0 0.0
        %841 = vmatprep.subr.mxu0 0.0
        %842 = vmatpush1.msra.mxu0 0.0
        %843 = vmatprep.subr.mxu0 0.0
        %844 = vmatpush1.msra.mxu0 0.0
        %845 = vmatprep.mubr.f32.mxu0 0.0
        %846 = vmatmul.mubr.f32.gmra.mrb[0].mxu0 %v779
        %v847 = vpop.f32.mrb[0].mxu0
        %v848 = vadd.f32 %v775, %v847
        %v849 = vpop.f32.mrb[0].mxu0
        %850 = vdwg.mxu0
        %v851 = vtanh.pop %v848
        %852 = vrot.lane.b32.xlu0 %v362, 64
        %v853 = vpop.permute.xlu0 %852
        %856 = vrot.lane.b32.xlu0 %v351, 32
        %v857 = vpop.permute.xlu0 %856
        %859 = vrot.lane.b32.xlu0 %v363, 96
        %v860 = vpop.permute.xlu0 %859
        %v862 = vsel %vm214, %v851, %v853
        %v863 = vsel %vm216, %v862, %v857
        %v864 = vsel %vm252, %v863, %v860
        %865 = vst [vmem:[%s188] sm:$0x3] %v864
        %s866 = sand.u32 %s115, 1
        %s867 = scalar_lea.sflag [#allocation4], %s866
        %s868 = sand.u32 %s115, 1
        %s869 = smul.addr %s868, 2
        %s870 = scalar_lea.vmem [#allocation3], %s869
        // Predicated region
        $region41: #{tpu_custom_call.1} parent=35 // pred_check
          %p871 = pneg %p125
        $region42: #{tpu_custom_call.1} parent=35 // pred_check_branch
          %873 = sbr.rel (%p871) target = $region44
        $region43: #{tpu_custom_call.1} parent=35 // pred_region
          %s875 = ssub.s32 32, 32
          %876 = vsyncadd %s867, %s875
          %s877 = smul.addr %s18, 32
          %s878 = scalar_lea.hbm %s4, %s877
          %s880 = sshll.u32 %s870, 4
          %s881 = int_to_ptr.vmem [resolvable:$true] %s880
          %883 = dma.vmem_to_hbm [thread:$0]  %s881, 32, %s878, %s867
        $region44: #{tpu_custom_call.1} parent=35 // pred_fallthru
          _
      $region36: #{tpu_custom_call.1} parent=5 // pred_fallthru
        _
      %p884 = scmp.le.s32.totalorder 2, %s13
      // Predicated region
      $region45: #{tpu_custom_call.1} parent=5 // pred_check
        %p885 = pneg %p884
      $region46: #{tpu_custom_call.1} parent=5 // pred_check_branch
        %887 = sbr.rel (%p885) target = $region48
      $region47: #{tpu_custom_call.1} parent=5 // pred_region
        %s888 = ssub.s32 %s13, 2
        // Predicated region
        $region49: #{tpu_custom_call.1} parent=47 // pred_check
          %p889 = pneg %p131
        $region50: #{tpu_custom_call.1} parent=47 // pred_check_branch
          %891 = sbr.rel (%p889) target = $region52
        $region51: #{tpu_custom_call.1} parent=47 // pred_region
          %s892 = sand.u32 %s116, 1
          %s893 = scalar_lea.sflag [#allocation4], %s892
          %s894 = sand.u32 %s116, 1
          %s895 = smul.addr %s894, 2
          %s896 = scalar_lea.vmem [#allocation3], %s895
          %897 = dma.done %s893, 32
        $region52: #{tpu_custom_call.1} parent=47 // pred_fallthru
          _
      $region48: #{tpu_custom_call.1} parent=5 // pred_fallthru
        _
    $region6: #{tpu_custom_call.1} parent=1 // loop_footer
      %s17 = sadd.s32 1, %s13
    $region7: #{tpu_custom_call.1} parent=1 // loop_footer_branch
      %12 = sbr.rel target = $region3
    $region8: #{tpu_custom_call.1} parent=1 // loop_exit
      _
    %898 = vsyncpa [#allocation4], 1
    %s899 = scalar_lea.sflag [#allocation4], 1
    %900 = vsyncpa %s899, 1

</llo_original>
